<compile_context>
chip_gen: v7x
topology: tpu7x:2x2x1
jax: 0.10.0
libtpu: 0.0.40
codegen_flags: <defaults>
</compile_context>

<pallas_src>
import functools

import numpy as np
import jax
import jax.numpy as jnp
from jax.experimental import pallas as pl
from jax.experimental.pallas import tpu as pltpu

LANE = 128
SUBLANE = 8


def _ceil_to(n, m):
    return ((n + m - 1) // m) * m


def _pad2d(a, rows, cols):
    return jnp.pad(a, ((0, rows - a.shape[0]), (0, cols - a.shape[1])))


def _bf16_eup_supported():
    # v6e / v7x EUPs run tanh at bf16 (~2x f32); v5e and older do not.
    try:
        kind = jax.devices()[0].device_kind.lower()
    except Exception:
        return False
    return ("v6" in kind) or ("v7" in kind)


@functools.lru_cache(maxsize=64)
def _build_schedule(seq_len, n_pad, b_p):
    """seq2sents metadata: per-sentence segment id (-1 for padding rows) and
    per-sequence 1/len.  Cached so repeated steps with the same seq_len reuse
    the device arrays."""
    seg = np.full((1, n_pad), -1, np.int32)
    inv = np.zeros((b_p, 1), np.float32)
    off = 0
    for i, ln in enumerate(seq_len):
        seg[0, off:off + ln] = i
        inv[i, 0] = 1.0 / float(ln) if ln > 0 else 0.0
        off += ln
    return jnp.asarray(seg), jnp.asarray(inv)


def _trainer_fwd_kernel(x_ref, seg_ref, inv_ref, w1_ref, b1_ref, w2_ref, b2_ref,
                        wc_ref, bc_ref, out_ref, pooled_acc, *,
                        label_cnt, n_sents, mask_rows, use_bf16_act):
    k = pl.program_id(0)
    tile_n = x_ref.shape[0]
    b_p = pooled_acc.shape[0]

    @pl.when(k == 0)
    def _():
        pooled_acc[...] = jnp.zeros_like(pooled_acc)

    # sent2vec: per-sentence Linear + tanh.  x comes in unpadded f32; cast to
    # bf16 in-register for the MXU (f32 accumulate).  Rows past n_sents in a
    # partial last tile are zeroed so undefined data never reaches the sums.
    xv = x_ref[...]
    if mask_rows:
        row_g = k * tile_n + jax.lax.broadcasted_iota(jnp.int32, (tile_n, 1), 0)
        xv = jnp.where(row_g < n_sents, xv, 0.0)
    acts = jnp.dot(xv.astype(jnp.bfloat16), w1_ref[...],
                   preferred_element_type=jnp.float32) + b1_ref[...]
    if use_bf16_act:
        sent_vecs = jnp.tanh(acts.astype(jnp.bfloat16))     # bf16 EUP (v6e/v7x)
    else:
        sent_vecs = jnp.tanh(acts).astype(jnp.bfloat16)     # f32 EUP (v5e)

    # seq2sents regroup + sum pool: one-hot routing matrix built in-register
    # from the streamed segment ids (padding rows carry id -1, never match).
    rows = jax.lax.broadcasted_iota(jnp.int32, (b_p, tile_n), 0)
    one_hot = (rows == seg_ref[...]).astype(jnp.bfloat16)
    pooled_acc[...] += jnp.dot(one_hot, sent_vecs,
                               preferred_element_type=jnp.float32)

    @pl.when(k == pl.num_programs(0) - 1)
    def _():
        pooled = pooled_acc[...] * inv_ref[...]              # mean pool (f32)

        # prop_model tail: Linear + tanh
        h = jnp.dot(pooled.astype(jnp.bfloat16), w2_ref[...],
                    preferred_element_type=jnp.float32) + b2_ref[...]
        seq_outs = jnp.tanh(h.astype(jnp.bfloat16) if use_bf16_act else h)

        # classifier + softmax(dim=1) over the real label columns only
        logits = jnp.dot(seq_outs.astype(jnp.bfloat16), wc_ref[...],
                         preferred_element_type=jnp.float32) + bc_ref[...]
        if label_cnt < logits.shape[1]:
            cols = jax.lax.broadcasted_iota(jnp.int32, logits.shape, 1)
            logits = jnp.where(cols < label_cnt, logits, -1e30)
        m = jnp.max(logits, axis=1, keepdims=True)
        e = jnp.exp(logits - m)
        out_ref[...] = e / jnp.sum(e, axis=1, keepdims=True)  # exact normalize


def trainer_forward(x, seq_len, w1, b1, w2, b2, wc, bc, *, tile_n=2048):
    """x: [N_sents, in_dim] f32 flattened sentences, seq_len: per-sequence
    sentence counts (the seq2sents() regrouping).  Returns preds [B, label_cnt]."""
    n_sents, in_dim = x.shape
    sent_hidden = w1.shape[1]
    prop_hidden = w2.shape[1]
    label_cnt = wc.shape[1]
    batch = len(seq_len)

    assert sum(int(l) for l in seq_len) == n_sents, "sum(seq_len) != x.shape[0]"
    assert tile_n % LANE == 0, "tile_n must be a multiple of 128"

    # Pad only the small dims (hidden sizes / labels to 128 lanes, batch to a
    # sublane multiple).  x itself is streamed as-is.
    hs_p = _ceil_to(sent_hidden, LANE)
    hp_p = _ceil_to(prop_hidden, LANE)
    lc_p = _ceil_to(label_cnt, LANE)
    b_p = _ceil_to(batch, SUBLANE)

    # Tile over the flattened-sentence axis ("arbitrary" reduction).
    if n_sents <= tile_n:
        tile_eff = max(SUBLANE, _ceil_to(n_sents, SUBLANE))   # single tile
    else:
        tile_eff = tile_n                                     # 128-multiple tiles
    n_tiles = -(-n_sents // tile_eff)
    n_pad = n_tiles * tile_eff
    mask_rows = n_pad != n_sents

    # Weights/biases: tiny; padded + cast once, DMA'd once, resident in VMEM.
    w1_p = _pad2d(w1, in_dim, hs_p).astype(jnp.bfloat16)
    b1_p = _pad2d(b1, 1, hs_p).astype(jnp.float32)
    w2_p = _pad2d(w2, hs_p, hp_p).astype(jnp.bfloat16)
    b2_p = _pad2d(b2, 1, hp_p).astype(jnp.float32)
    wc_p = _pad2d(wc, hp_p, lc_p).astype(jnp.bfloat16)
    bc_p = _pad2d(bc, 1, lc_p).astype(jnp.float32)

    seg, inv = _build_schedule(tuple(int(l) for l in seq_len), n_pad, b_p)

    # VMEM budget: double-buffered x/seg tiles + (double-buffered) resident
    # weights + accumulator/output; clamp to [32, 48] MiB so the same spec
    # stays inside v7x's 64 MiB physical VMEM while allowing large tiles.
    est = (2 * (tile_eff * max(in_dim, LANE) * x.dtype.itemsize + tile_eff * 4)
           + 4 * (in_dim * hs_p + hs_p * hp_p + hp_p * lc_p)     # bf16 x2 bufs
           + 4 * (hs_p + hp_p + lc_p)
           + 4 * b_p * (hs_p + lc_p + 1))
    vmem_limit = int(min(max(2 * est, 32 << 20), 48 << 20))

    kernel = functools.partial(
        _trainer_fwd_kernel, label_cnt=label_cnt, n_sents=n_sents,
        mask_rows=mask_rows, use_bf16_act=_bf16_eup_supported())
    resident = lambda k: (0, 0)   # constant index map -> DMA'd once, resident

    out_p = pl.pallas_call(
        kernel,
        out_shape=jax.ShapeDtypeStruct((b_p, lc_p), jnp.float32),
        grid=(n_tiles,),
        in_specs=[
            pl.BlockSpec((tile_eff, in_dim), lambda k: (k, 0)),   # x (streamed)
            pl.BlockSpec((1, tile_eff), lambda k: (0, k)),        # segment ids
            pl.BlockSpec((b_p, 1), resident),                     # 1/len
            pl.BlockSpec((in_dim, hs_p), resident),               # w1
            pl.BlockSpec((1, hs_p), resident),                    # b1
            pl.BlockSpec((hs_p, hp_p), resident),                 # w2
            pl.BlockSpec((1, hp_p), resident),                    # b2
            pl.BlockSpec((hp_p, lc_p), resident),                 # wc
            pl.BlockSpec((1, lc_p), resident),                    # bc
        ],
        out_specs=pl.BlockSpec((b_p, lc_p), resident),
        scratch_shapes=[pltpu.VMEM((b_p, hs_p), jnp.float32)],
        compiler_params=pltpu.CompilerParams(
            dimension_semantics=("arbitrary",),
            vmem_limit_bytes=vmem_limit),
    )(x, seg, inv, w1_p, b1_p, w2_p, b2_p, wc_p, bc_p)

    return out_p[:batch, :label_cnt]


def reference_forward(x, seq_len, w1, b1, w2, b2, wc, bc):
    """Plain-JAX f32 reference of the same forward pass."""
    sent_vecs = jnp.tanh(x @ w1 + b1)
    pooled, off = [], 0
    for ln in seq_len:
        pooled.append(jnp.mean(sent_vecs[off:off + ln], axis=0))
        off += ln
    pooled = jnp.stack(pooled, axis=0)
    seq_outs = jnp.tanh(pooled @ w2 + b2)
    logits = seq_outs @ wc + bc
    return jax.nn.softmax(logits, axis=1)


if __name__ == "__main__":
    key = jax.random.PRNGKey(0)

    # Small synthetic config.
    in_dim, sent_hidden, prop_hidden, label_cnt = 32, 32, 32, 2
    seq_len = [3, 5]            # two sequences -> batch B = 2
    n_sents = sum(seq_len)      # flattened sentence count (seq2sents)
    B = len(seq_len)

    keys = jax.random.split(key, 7)
    x = jax.random.normal(keys[0], (n_sents, in_dim), jnp.float32)
    w1 = jax.random.normal(keys[1], (in_dim, sent_hidden), jnp.float32) * 0.1
    b1 = jax.random.normal(keys[2], (1, sent_hidden), jnp.float32) * 0.01
    w2 = jax.random.normal(keys[3], (sent_hidden, prop_hidden), jnp.float32) * 0.1
    b2 = jax.random.normal(keys[4], (1, prop_hidden), jnp.float32) * 0.01
    wc = jax.random.normal(keys[5], (prop_hidden, label_cnt), jnp.float32) * 0.1
    bc = jax.random.normal(keys[6], (1, label_cnt), jnp.float32) * 0.01

    preds = trainer_forward(x, seq_len, w1, b1, w2, b2, wc, bc)
    preds = jax.block_until_ready(preds)

    ref = reference_forward(x, seq_len, w1, b1, w2, b2, wc, bc)

    assert preds.shape == (B, label_cnt)
    assert jnp.allclose(jnp.sum(preds, axis=1), 1.0, atol=1e-2)
    assert jnp.allclose(preds, ref, atol=3e-2), (preds, ref)

    print("KERNEL_OK")
</pallas_src>

<mosaic_0001>
module attributes {stable_mosaic.version = 11 : i64} {
  func.func @_trainer_fwd_kernel(%arg0: i32, %arg1: memref<8x32xf32, #tpu.memory_space<vmem>>, %arg2: memref<1x8xi32, #tpu.memory_space<vmem>>, %arg3: memref<8x1xf32, #tpu.memory_space<vmem>>, %arg4: memref<32x128xbf16, #tpu.memory_space<vmem>>, %arg5: memref<1x128xf32, #tpu.memory_space<vmem>>, %arg6: memref<128x128xbf16, #tpu.memory_space<vmem>>, %arg7: memref<1x128xf32, #tpu.memory_space<vmem>>, %arg8: memref<128x128xbf16, #tpu.memory_space<vmem>>, %arg9: memref<1x128xf32, #tpu.memory_space<vmem>>, %arg10: memref<8x128xf32, #tpu.memory_space<vmem>>, %arg11: memref<8x128xf32, #tpu.memory_space<vmem>>) attributes {dimension_semantics = [#tpu.dimension_semantics<arbitrary>], iteration_bounds = array<i64: 1>, scalar_prefetch = 0 : i64, scratch_operands = 1 : i64, tpu.core_type = #tpu.core_type<tc>, window_params = [{transform_indices = @transform_0, window_bounds = array<i64: 8, 32>}, {transform_indices = @transform_1, window_bounds = array<i64: 1, 8>}, {pipeline_mode = #tpu.pipeline_mode<synchronous>, transform_indices = @transform_2, window_bounds = array<i64: 8, 1>}, {pipeline_mode = #tpu.pipeline_mode<synchronous>, transform_indices = @transform_3, window_bounds = array<i64: 32, 128>}, {pipeline_mode = #tpu.pipeline_mode<synchronous>, transform_indices = @transform_4, window_bounds = array<i64: 1, 128>}, {pipeline_mode = #tpu.pipeline_mode<synchronous>, transform_indices = @transform_5, window_bounds = array<i64: 128, 128>}, {pipeline_mode = #tpu.pipeline_mode<synchronous>, transform_indices = @transform_6, window_bounds = array<i64: 1, 128>}, {pipeline_mode = #tpu.pipeline_mode<synchronous>, transform_indices = @transform_7, window_bounds = array<i64: 128, 128>}, {pipeline_mode = #tpu.pipeline_mode<synchronous>, transform_indices = @transform_8, window_bounds = array<i64: 1, 128>}, {pipeline_mode = #tpu.pipeline_mode<synchronous>, transform_indices = @transform_9, window_bounds = array<i64: 8, 128>}]} {
    %c0_i32 = arith.constant 0 : i32
    %0 = arith.cmpi eq, %arg0, %c0_i32 : i32
    %1 = arith.extui %0 : i1 to i32
    %c0_i32_0 = arith.constant 0 : i32
    %2 = arith.cmpi ne, %1, %c0_i32_0 : i32
    scf.if %2 {
      %cst_15 = arith.constant 0.000000e+00 : f32
      %26 = vector.broadcast %cst_15 : f32 to vector<8x128xf32>
      %c0_16 = arith.constant 0 : index
      %c0_17 = arith.constant 0 : index
      %27 = vector.load %arg11[%c0_16, %c0_17] : memref<8x128xf32, #tpu.memory_space<vmem>>, vector<8x128xf32>
      tpu.vector_store %arg11[%c0_16, %c0_17], %26 {strides = array<i32>} : memref<8x128xf32, #tpu.memory_space<vmem>>, vector<8x128xf32>,
    } else {
    }
    %c0 = arith.constant 0 : index
    %c0_1 = arith.constant 0 : index
    %3 = vector.load %arg1[%c0, %c0_1] : memref<8x32xf32, #tpu.memory_space<vmem>>, vector<8x32xf32>
    %4 = arith.truncf %3 : vector<8x32xf32> to vector<8x32xbf16>
    %c0_2 = arith.constant 0 : index
    %c0_3 = arith.constant 0 : index
    %5 = vector.load %arg4[%c0_2, %c0_3] : memref<32x128xbf16, #tpu.memory_space<vmem>>, vector<32x128xbf16>
    %cst = arith.constant dense<0.000000e+00> : vector<8x128xf32>
    %6 = tpu.matmul %4, %5, %cst {dimension_numbers = #tpu.dot_dimension_numbers<[1], [0], [0], [1], [0, 0, 1, 1], [], []>} : vector<8x32xbf16>, vector<32x128xbf16>, vector<8x128xf32> -> vector<8x128xf32>
    %c0_4 = arith.constant 0 : index
    %c0_5 = arith.constant 0 : index
    %7 = vector.load %arg5[%c0_4, %c0_5] : memref<1x128xf32, #tpu.memory_space<vmem>>, vector<1x128xf32>
    %8 = vector.broadcast %7 : vector<1x128xf32> to vector<8x128xf32>
    %9 = arith.addf %6, %8 : vector<8x128xf32>
    %10 = math.tanh %9 : vector<8x128xf32>
    %11 = arith.truncf %10 : vector<8x128xf32> to vector<8x128xbf16>
    %12 = tpu.iota {dimensions = array<i32: 0>} : vector<8x8xi32>
    %c0_6 = arith.constant 0 : index
    %c0_7 = arith.constant 0 : index
    %13 = vector.load %arg2[%c0_6, %c0_7] : memref<1x8xi32, #tpu.memory_space<vmem>>, vector<1x8xi32>
    %14 = vector.broadcast %13 : vector<1x8xi32> to vector<8x8xi32>
    %15 = arith.cmpi eq, %12, %14 : vector<8x8xi32>
    %16 = arith.extui %15 : vector<8x8xi1> to vector<8x8xi32>
    %17 = arith.sitofp %16 : vector<8x8xi32> to vector<8x8xf32>
    %18 = arith.truncf %17 : vector<8x8xf32> to vector<8x8xbf16>
    %c0_8 = arith.constant 0 : index
    %c0_9 = arith.constant 0 : index
    %19 = vector.load %arg11[%c0_8, %c0_9] : memref<8x128xf32, #tpu.memory_space<vmem>>, vector<8x128xf32>
    %cst_10 = arith.constant dense<0.000000e+00> : vector<8x128xf32>
    %20 = tpu.matmul %18, %11, %cst_10 {dimension_numbers = #tpu.dot_dimension_numbers<[1], [0], [0], [1], [0, 0, 1, 1], [], []>} : vector<8x8xbf16>, vector<8x128xbf16>, vector<8x128xf32> -> vector<8x128xf32>
    %21 = arith.addf %19, %20 : vector<8x128xf32>
    %c0_11 = arith.constant 0 : index
    %c0_12 = arith.constant 0 : index
    %22 = vector.load %arg11[%c0_11, %c0_12] : memref<8x128xf32, #tpu.memory_space<vmem>>, vector<8x128xf32>
    tpu.vector_store %arg11[%c0_11, %c0_12], %21 {strides = array<i32>} : memref<8x128xf32, #tpu.memory_space<vmem>>, vector<8x128xf32>,
    %c0_i32_13 = arith.constant 0 : i32
    %23 = arith.cmpi eq, %arg0, %c0_i32_13 : i32
    %24 = arith.extui %23 : i1 to i32
    %c0_i32_14 = arith.constant 0 : i32
    %25 = arith.cmpi ne, %24, %c0_i32_14 : i32
    scf.if %25 {
      %c0_15 = arith.constant 0 : index
      %c0_16 = arith.constant 0 : index
      %26 = vector.load %arg11[%c0_15, %c0_16] : memref<8x128xf32, #tpu.memory_space<vmem>>, vector<8x128xf32>
      %c0_17 = arith.constant 0 : index
      %c0_18 = arith.constant 0 : index
      %27 = vector.load %arg3[%c0_17, %c0_18] : memref<8x1xf32, #tpu.memory_space<vmem>>, vector<8x1xf32>
      %28 = vector.broadcast %27 : vector<8x1xf32> to vector<8x128xf32>
      %29 = arith.mulf %26, %28 : vector<8x128xf32>
      %30 = arith.truncf %29 : vector<8x128xf32> to vector<8x128xbf16>
      %c0_19 = arith.constant 0 : index
      %c0_20 = arith.constant 0 : index
      %31 = vector.load %arg6[%c0_19, %c0_20] : memref<128x128xbf16, #tpu.memory_space<vmem>>, vector<128x128xbf16>
      %cst_21 = arith.constant dense<0.000000e+00> : vector<8x128xf32>
      %32 = tpu.matmul %30, %31, %cst_21 {dimension_numbers = #tpu.dot_dimension_numbers<[1], [0], [0], [1], [0, 0, 1, 1], [], []>} : vector<8x128xbf16>, vector<128x128xbf16>, vector<8x128xf32> -> vector<8x128xf32>
      %c0_22 = arith.constant 0 : index
      %c0_23 = arith.constant 0 : index
      %33 = vector.load %arg7[%c0_22, %c0_23] : memref<1x128xf32, #tpu.memory_space<vmem>>, vector<1x128xf32>
      %34 = vector.broadcast %33 : vector<1x128xf32> to vector<8x128xf32>
      %35 = arith.addf %32, %34 : vector<8x128xf32>
      %36 = math.tanh %35 : vector<8x128xf32>
      %37 = arith.truncf %36 : vector<8x128xf32> to vector<8x128xbf16>
      %c0_24 = arith.constant 0 : index
      %c0_25 = arith.constant 0 : index
      %38 = vector.load %arg8[%c0_24, %c0_25] : memref<128x128xbf16, #tpu.memory_space<vmem>>, vector<128x128xbf16>
      %cst_26 = arith.constant dense<0.000000e+00> : vector<8x128xf32>
      %39 = tpu.matmul %37, %38, %cst_26 {dimension_numbers = #tpu.dot_dimension_numbers<[1], [0], [0], [1], [0, 0, 1, 1], [], []>} : vector<8x128xbf16>, vector<128x128xbf16>, vector<8x128xf32> -> vector<8x128xf32>
      %c0_27 = arith.constant 0 : index
      %c0_28 = arith.constant 0 : index
      %40 = vector.load %arg9[%c0_27, %c0_28] : memref<1x128xf32, #tpu.memory_space<vmem>>, vector<1x128xf32>
      %41 = vector.broadcast %40 : vector<1x128xf32> to vector<8x128xf32>
      %42 = arith.addf %39, %41 : vector<8x128xf32>
      %43 = tpu.iota {dimensions = array<i32: 1>} : vector<8x128xi32>
      %c2_i32 = arith.constant 2 : i32
      %44 = vector.broadcast %c2_i32 : i32 to vector<8x128xi32>
      %45 = arith.cmpi slt, %43, %44 : vector<8x128xi32>
      %cst_29 = arith.constant -1.000000e+30 : f32
      %46 = vector.broadcast %cst_29 : f32 to vector<8x128xf32>
      %47 = arith.select %45, %42, %46 : vector<8x128xi1>, vector<8x128xf32>
      %cst_30 = arith.constant dense<0xFF800000> : vector<8xf32>
      %48 = vector.multi_reduction <maximumf>, %47, %cst_30 [1] : vector<8x128xf32> to vector<8xf32>
      %49 = vector.shape_cast %48 : vector<8xf32> to vector<8x1xf32>
      %50 = vector.broadcast %49 : vector<8x1xf32> to vector<8x128xf32>
      %51 = arith.subf %47, %50 : vector<8x128xf32>
      %52 = math.exp %51 : vector<8x128xf32>
      %cst_31 = arith.constant dense<0.000000e+00> : vector<8xf32>
      %53 = vector.multi_reduction <add>, %52, %cst_31 [1] : vector<8x128xf32> to vector<8xf32>
      %54 = vector.shape_cast %53 : vector<8xf32> to vector<8x1xf32>
      %55 = vector.broadcast %54 : vector<8x1xf32> to vector<8x128xf32>
      %56 = arith.divf %52, %55 : vector<8x128xf32>
      %c0_32 = arith.constant 0 : index
      %c0_33 = arith.constant 0 : index
      %57 = vector.load %arg10[%c0_32, %c0_33] : memref<8x128xf32, #tpu.memory_space<vmem>>, vector<8x128xf32>
      tpu.vector_store %arg10[%c0_32, %c0_33], %56 {strides = array<i32>} : memref<8x128xf32, #tpu.memory_space<vmem>>, vector<8x128xf32>,
    } else {
    }
    return
  }
  func.func @transform_0(%arg0: i32) -> (i32, i32) {
    %c0_i32 = arith.constant 0 : i32
    %c0_i32_0 = arith.constant 0 : i32
    return %arg0, %c0_i32 : i32, i32
  }
  func.func @transform_1(%arg0: i32) -> (i32, i32) {
    %c0_i32 = arith.constant 0 : i32
    %c0_i32_0 = arith.constant 0 : i32
    return %c0_i32, %arg0 : i32, i32
  }
  func.func @transform_2(%arg0: i32) -> (i32, i32) {
    %c0_i32 = arith.constant 0 : i32
    %c0_i32_0 = arith.constant 0 : i32
    %c0_i32_1 = arith.constant 0 : i32
    return %c0_i32, %c0_i32_0 : i32, i32
  }
  func.func @transform_3(%arg0: i32) -> (i32, i32) {
    %c0_i32 = arith.constant 0 : i32
    %c0_i32_0 = arith.constant 0 : i32
    %c0_i32_1 = arith.constant 0 : i32
    return %c0_i32, %c0_i32_0 : i32, i32
  }
  func.func @transform_4(%arg0: i32) -> (i32, i32) {
    %c0_i32 = arith.constant 0 : i32
    %c0_i32_0 = arith.constant 0 : i32
    %c0_i32_1 = arith.constant 0 : i32
    return %c0_i32, %c0_i32_0 : i32, i32
  }
  func.func @transform_5(%arg0: i32) -> (i32, i32) {
    %c0_i32 = arith.constant 0 : i32
    %c0_i32_0 = arith.constant 0 : i32
    %c0_i32_1 = arith.constant 0 : i32
    return %c0_i32, %c0_i32_0 : i32, i32
  }
  func.func @transform_6(%arg0: i32) -> (i32, i32) {
    %c0_i32 = arith.constant 0 : i32
    %c0_i32_0 = arith.constant 0 : i32
    %c0_i32_1 = arith.constant 0 : i32
    return %c0_i32, %c0_i32_0 : i32, i32
  }
  func.func @transform_7(%arg0: i32) -> (i32, i32) {
    %c0_i32 = arith.constant 0 : i32
    %c0_i32_0 = arith.constant 0 : i32
    %c0_i32_1 = arith.constant 0 : i32
    return %c0_i32, %c0_i32_0 : i32, i32
  }
  func.func @transform_8(%arg0: i32) -> (i32, i32) {
    %c0_i32 = arith.constant 0 : i32
    %c0_i32_0 = arith.constant 0 : i32
    %c0_i32_1 = arith.constant 0 : i32
    return %c0_i32, %c0_i32_0 : i32, i32
  }
  func.func @transform_9(%arg0: i32) -> (i32, i32) {
    %c0_i32 = arith.constant 0 : i32
    %c0_i32_0 = arith.constant 0 : i32
    %c0_i32_1 = arith.constant 0 : i32
    return %c0_i32, %c0_i32_0 : i32, i32
  }
}

</mosaic_0001>

<llo_original>
// kernel: tpu_custom_call.1
$region0: #{tpu_custom_call.1}
  #allocation0 [shape = 'u32[]', space=smem, size = 0x4, offset = 0x4, fixed_abs, tag = 'smem constant byte address 0x4 - core index']
  #allocation1 [shape = 'u32[144,128]{1,0:T(1,128)}', space=vmem, size = 0x12000, scoped, tag = 'internal scratch']
  #allocation2 [shape = 'f32[8,128]{1,0:T(8,128)}', space=vmem, size = 0x1000, scoped, tag = 'scratch operand']
  %s0 = inlined_call_operand.hbm [shape: f32[8,32], index: 0, kind: input, shape index: {}]
  %s1 = inlined_call_operand.vmem [shape: s32[1,8], index: 1, kind: input, shape index: {}]
  %s2 = inlined_call_operand.vmem [shape: f32[8,1], index: 2, kind: input, shape index: {}]
  %s3 = inlined_call_operand.vmem [shape: bf16[32,128], index: 3, kind: input, shape index: {}]
  %s4 = inlined_call_operand.vmem [shape: f32[1,128], index: 4, kind: input, shape index: {}]
  %s5 = inlined_call_operand.hbm [shape: bf16[128,128], index: 5, kind: input, shape index: {}]
  %s6 = inlined_call_operand.vmem [shape: f32[1,128], index: 6, kind: input, shape index: {}]
  %s7 = inlined_call_operand.hbm [shape: bf16[128,128], index: 7, kind: input, shape index: {}]
  %s8 = inlined_call_operand.vmem [shape: f32[1,128], index: 8, kind: input, shape index: {}]
  %s9 = inlined_call_operand.hbm [shape: f32[8,128], index: 9, kind: output, shape index: {}]
  %s10 = sld [smem:[#allocation0]]
  $region66: #{tpu_custom_call.1} parent=0
    _
  %s12 = ssub.s32 1, %s10
  %s13 = scalar_select 0, %s12, %s10
  $region1: #{tpu_custom_call.1} parent=0
    #allocation3 [shape = 'u8[4096]{0}', space=vmem, size = 0x1000, scoped, tag = 'input window, operand 0, single buffered']
    #allocation4 [shape = 's32[1]{0}', space=sflag, size = 0x4, scoped, tag = 'scoped memory for tpu_custom_call.1']
    #allocation5 [shape = 's32[1]{0}', space=sflag, size = 0x4, scoped, tag = 'scoped memory for tpu_custom_call.1']
    #allocation6 [shape = 'u8[32768]{0}', space=vmem, size = 0x8000, scoped, tag = 'input window, operand 5, single buffered']
    #allocation7 [shape = 's32[1]{0}', space=sflag, size = 0x4, scoped, tag = 'scoped memory for tpu_custom_call.1']
    #allocation8 [shape = 'u8[32768]{0}', space=vmem, size = 0x8000, scoped, tag = 'input window, operand 7, single buffered']
    #allocation9 [shape = 'u8[4096]{0}', space=vmem, size = 0x1000, scoped, tag = 'output window, operand 0, single buffered']
    %14 = vsyncpa [#allocation4], 0
    %15 = vsyncpa [#allocation7], 0
    %16 = vsyncpa [#allocation5], 0
    // Predicated region
    $region2: #{tpu_custom_call.1} parent=1 // pred_check
      _
    $region3: #{tpu_custom_call.1} parent=1 // pred_check_branch
      %18 = sbr.rel (0) target = $region5
    $region4: #{tpu_custom_call.1} parent=1 // pred_region
      %s20 = ssub.s32 128, 128
      %21 = vsyncadd [#allocation4], %s20
      %s23 = sshll.u32 [#allocation3], 4
      %s24 = int_to_ptr.vmem [resolvable:$true] %s23
      %26 = dma.hbm_to_vmem [thread:$0]  %s0, 128, %s24, [#allocation4]
    $region5: #{tpu_custom_call.1} parent=1 // pred_fallthru
      _
    // Predicated region
    $region6: #{tpu_custom_call.1} parent=1 // pred_check
      _
    $region7: #{tpu_custom_call.1} parent=1 // pred_check_branch
      %28 = sbr.rel (0) target = $region9
    $region8: #{tpu_custom_call.1} parent=1 // pred_region
      _
    $region9: #{tpu_custom_call.1} parent=1 // pred_fallthru
      _
    // Predicated region
    $region10: #{tpu_custom_call.1} parent=1 // pred_check
      _
    $region11: #{tpu_custom_call.1} parent=1 // pred_check_branch
      %30 = sbr.rel (0) target = $region13
    $region12: #{tpu_custom_call.1} parent=1 // pred_region
      _
    $region13: #{tpu_custom_call.1} parent=1 // pred_fallthru
      _
    // Predicated region
    $region14: #{tpu_custom_call.1} parent=1 // pred_check
      _
    $region15: #{tpu_custom_call.1} parent=1 // pred_check_branch
      %32 = sbr.rel (0) target = $region17
    $region16: #{tpu_custom_call.1} parent=1 // pred_region
      _
    $region17: #{tpu_custom_call.1} parent=1 // pred_fallthru
      _
    // Predicated region
    $region18: #{tpu_custom_call.1} parent=1 // pred_check
      _
    $region19: #{tpu_custom_call.1} parent=1 // pred_check_branch
      %34 = sbr.rel (0) target = $region21
    $region20: #{tpu_custom_call.1} parent=1 // pred_region
      _
    $region21: #{tpu_custom_call.1} parent=1 // pred_fallthru
      _
    // Predicated region
    $region22: #{tpu_custom_call.1} parent=1 // pred_check
      _
    $region23: #{tpu_custom_call.1} parent=1 // pred_check_branch
      %36 = sbr.rel (0) target = $region25
    $region24: #{tpu_custom_call.1} parent=1 // pred_region
      %s38 = ssub.s32 1024, 1024
      %39 = vsyncadd [#allocation7], %s38
      %s40 = sshll.u32 [#allocation6], 4
      %s41 = int_to_ptr.vmem [resolvable:$true] %s40
      %46 = dma.hbm_to_vmem [thread:$0]  %s5, 1024, %s41, [#allocation7], 64, 64, 4
    $region25: #{tpu_custom_call.1} parent=1 // pred_fallthru
      _
    // Predicated region
    $region26: #{tpu_custom_call.1} parent=1 // pred_check
      _
    $region27: #{tpu_custom_call.1} parent=1 // pred_check_branch
      %48 = sbr.rel (0) target = $region29
    $region28: #{tpu_custom_call.1} parent=1 // pred_region
      _
    $region29: #{tpu_custom_call.1} parent=1 // pred_fallthru
      _
    // Predicated region
    $region30: #{tpu_custom_call.1} parent=1 // pred_check
      _
    $region31: #{tpu_custom_call.1} parent=1 // pred_check_branch
      %50 = sbr.rel (0) target = $region33
    $region32: #{tpu_custom_call.1} parent=1 // pred_region
      %s52 = ssub.s32 1024, 1024
      %53 = vsyncadd [#allocation7], %s52
      %s54 = sshll.u32 [#allocation8], 4
      %s55 = int_to_ptr.vmem [resolvable:$true] %s54
      %60 = dma.hbm_to_vmem [thread:$0]  %s7, 1024, %s55, [#allocation7], 64, 64, 4
    $region33: #{tpu_custom_call.1} parent=1 // pred_fallthru
      _
    // Predicated region
    $region34: #{tpu_custom_call.1} parent=1 // pred_check
      _
    $region35: #{tpu_custom_call.1} parent=1 // pred_check_branch
      %62 = sbr.rel (0) target = $region37
    $region36: #{tpu_custom_call.1} parent=1 // pred_region
      _
    $region37: #{tpu_custom_call.1} parent=1 // pred_fallthru
      _
    // Predicated region
    $region38: #{tpu_custom_call.1} parent=1 // pred_check
      _
    $region39: #{tpu_custom_call.1} parent=1 // pred_check_branch
      %64 = sbr.rel (0) target = $region41
    $region40: #{tpu_custom_call.1} parent=1 // pred_region
      %65 = dma.done [#allocation4], 128
    $region41: #{tpu_custom_call.1} parent=1 // pred_fallthru
      _
    // Predicated region
    $region42: #{tpu_custom_call.1} parent=1 // pred_check
      _
    $region43: #{tpu_custom_call.1} parent=1 // pred_check_branch
      %67 = sbr.rel (0) target = $region45
    $region44: #{tpu_custom_call.1} parent=1 // pred_region
      %68 = dma.done [#allocation7], 1024
    $region45: #{tpu_custom_call.1} parent=1 // pred_fallthru
      _
    // Predicated region
    $region46: #{tpu_custom_call.1} parent=1 // pred_check
      _
    $region47: #{tpu_custom_call.1} parent=1 // pred_check_branch
      %70 = sbr.rel (0) target = $region49
    $region48: #{tpu_custom_call.1} parent=1 // pred_region
      %71 = dma.done [#allocation7], 1024
    $region49: #{tpu_custom_call.1} parent=1 // pred_fallthru
      _
    %p73 = scmp.eq.s32.totalorder 0, 0
    // Predicated region
    $region50: #{tpu_custom_call.1} parent=1 // pred_check
      %p74 = pneg %p73
    $region51: #{tpu_custom_call.1} parent=1 // pred_check_branch
      %76 = sbr.rel (%p74) target = $region53
    $region52: #{tpu_custom_call.1} parent=1 // pred_region
      %77 = vst [vmem:[#allocation2] sm:$0xff] 0.0
    $region53: #{tpu_custom_call.1} parent=1 // pred_fallthru
      _
    %v78 = vld [vmem:[#allocation3] sm:$0xff]
    %v79 = vpack.c.bf16 %v78, %v78
    %v80 = vld [vmem:[%s3] sm:$0xf]
    %v81 = vld [vmem:[%s3 + $0x4] sm:$0xf]
    %v82 = vld [vmem:[%s3 + $0x8] sm:$0xf]
    %v83 = vld [vmem:[%s3 + $0xc] sm:$0xf]
    %v84 = vld [vmem:[%s4] sm:$0x1]
    %v86 = vlaneseq
    %v87 = vshrl.u32 %v86, 7
    %v88 = vsub.s32 0, %v87
    %v89 = vrot.slane %v84, %v88
    %v95 = vunpack.c.l.b16 %v80
    %v96 = vunpack.c.l.b16 %v81
    %v97 = vunpack.c.l.b16 %v82
    %v98 = vunpack.c.l.b16 %v83
    %v99 = vpack.c.b16 %v96, %v95
    %v100 = vpack.c.b16 %v98, %v97
    %vm103 = vcmask 261120
    %v105 = vsel %vm103, %v79, 0
    %107 = vmatprep.subr.bf16.mxu0 0
    %108 = vmatpush1.bf16.msra.mxu0 %v99
    %109 = vmatprep.subr.bf16.mxu0 0
    %110 = vmatpush1.bf16.msra.mxu0 %v100
    %111 = vmatprep.subr.bf16.mxu0 0
    %112 = vmatpush1.bf16.msra.mxu0 0
    %113 = vmatprep.subr.bf16.mxu0 0
    %114 = vmatpush1.bf16.msra.mxu0 0
    %115 = vmatprep.subr.bf16.mxu0 0
    %116 = vmatpush1.bf16.msra.mxu0 0
    %117 = vmatprep.subr.bf16.mxu0 0
    %118 = vmatpush1.bf16.msra.mxu0 0
    %119 = vmatprep.subr.bf16.mxu0 0
    %120 = vmatpush1.bf16.msra.mxu0 0
    %121 = vmatprep.subr.bf16.mxu0 0
    %122 = vmatpush1.bf16.msra.mxu0 0
    %123 = vmatprep.subr.bf16.mxu0 0
    %124 = vmatpush1.bf16.msra.mxu0 0
    %125 = vmatprep.subr.bf16.mxu0 0
    %126 = vmatpush1.bf16.msra.mxu0 0
    %127 = vmatprep.subr.bf16.mxu0 0
    %128 = vmatpush1.bf16.msra.mxu0 0
    %129 = vmatprep.subr.bf16.mxu0 0
    %130 = vmatpush1.bf16.msra.mxu0 0
    %131 = vmatprep.subr.bf16.mxu0 0
    %132 = vmatpush1.bf16.msra.mxu0 0
    %133 = vmatprep.subr.bf16.mxu0 0
    %134 = vmatpush1.bf16.msra.mxu0 0
    %135 = vmatprep.subr.bf16.mxu0 0
    %136 = vmatpush1.bf16.msra.mxu0 0
    %137 = vmatprep.subr.bf16.mxu0 0
    %138 = vmatpush1.bf16.msra.mxu0 0
    %139 = vmatprep.mubr.bf16.mxu0 0
    %140 = vmatmul.mubr.bf16.gmra.mrb[0].mxu0 %v105
    %v141 = vpop.f32.mrb[0].mxu0
    %v142 = vadd.f32 %v89, %v141
    %v143 = vpop.f32.mrb[0].mxu0
    %v144 = vpop.f32.mrb[0].mxu0
    %v145 = vpop.f32.mrb[0].mxu0
    %146 = vdwg.mxu0
    %v147 = vtanh.pop %v142
    %v148 = vpack.c.bf16 %v147, %v147
    %v149 = vlaneseq
    %v150 = vshrl.u32 %v149, 7
    %v151 = vld [vmem:[%s1] sm:$0x1]
    %v152 = vlaneseq
    %v153 = vshrl.u32 %v152, 7
    %v154 = vsub.s32 0, %v153
    %v155 = vrot.slane %v151, %v154
    %vm156 = vcmp.eq.s32.totalorder %v150, %v155
    %v157 = vsel %vm156, 1, 0
    %v158 = vcvt.s32.f32 %v157
    %v159 = vpack.c.bf16 %v158, %v158
    %v160 = vld [vmem:[#allocation2] sm:$0xff]
    %vm161 = vcmask 64512
    %v163 = vsel %vm161, %v159, 0
    %vm165 = vcmask 1043456
    %v167 = vsel %vm165, %v148, 0
    %169 = vmatprep.subr.bf16.mxu0 0
    %170 = vmatpush1.bf16.msra.mxu0 %v167
    %171 = vmatprep.subr.bf16.mxu0 0
    %172 = vmatpush1.bf16.msra.mxu0 0
    %173 = vmatprep.subr.bf16.mxu0 0
    %174 = vmatpush1.bf16.msra.mxu0 0
    %175 = vmatprep.subr.bf16.mxu0 0
    %176 = vmatpush1.bf16.msra.mxu0 0
    %177 = vmatprep.subr.bf16.mxu0 0
    %178 = vmatpush1.bf16.msra.mxu0 0
    %179 = vmatprep.subr.bf16.mxu0 0
    %180 = vmatpush1.bf16.msra.mxu0 0
    %181 = vmatprep.subr.bf16.mxu0 0
    %182 = vmatpush1.bf16.msra.mxu0 0
    %183 = vmatprep.subr.bf16.mxu0 0
    %184 = vmatpush1.bf16.msra.mxu0 0
    %185 = vmatprep.subr.bf16.mxu0 0
    %186 = vmatpush1.bf16.msra.mxu0 0
    %187 = vmatprep.subr.bf16.mxu0 0
    %188 = vmatpush1.bf16.msra.mxu0 0
    %189 = vmatprep.subr.bf16.mxu0 0
    %190 = vmatpush1.bf16.msra.mxu0 0
    %191 = vmatprep.subr.bf16.mxu0 0
    %192 = vmatpush1.bf16.msra.mxu0 0
    %193 = vmatprep.subr.bf16.mxu0 0
    %194 = vmatpush1.bf16.msra.mxu0 0
    %195 = vmatprep.subr.bf16.mxu0 0
    %196 = vmatpush1.bf16.msra.mxu0 0
    %197 = vmatprep.subr.bf16.mxu0 0
    %198 = vmatpush1.bf16.msra.mxu0 0
    %199 = vmatprep.subr.bf16.mxu0 0
    %200 = vmatpush1.bf16.msra.mxu0 0
    %201 = vmatprep.mubr.bf16.mxu0 0
    %202 = vmatmul.mubr.bf16.gmra.mrb[0].mxu0 %v163
    %v203 = vpop.f32.mrb[0].mxu0
    %v204 = vadd.f32 0.0, %v203
    %v205 = vpop.f32.mrb[0].mxu0
    %v206 = vpop.f32.mrb[0].mxu0
    %v207 = vpop.f32.mrb[0].mxu0
    %208 = vdwg.mxu0
    %v209 = vadd.f32 %v160, %v204
    %210 = vst [vmem:[#allocation2] sm:$0xff] %v209
    // Predicated region
    $region54: #{tpu_custom_call.1} parent=1 // pred_check
      %p211 = pneg %p73
    $region55: #{tpu_custom_call.1} parent=1 // pred_check_branch
      %213 = sbr.rel (%p211) target = $region57
    $region56: #{tpu_custom_call.1} parent=1 // pred_region
      %v214 = vld [vmem:[#allocation2] sm:$0xff]
      %v215 = vld [vmem:[%s2] sm:$0xff]
      %217 = vset.pattern.permute.xlu0 0
      %218 = vperm.xlu0 %217, %v215
      %v219 = vpop.permute.xlu0 %218
      %v221 = vmul.f32 %v214, %v219
      %v222 = vpack.c.bf16 %v221, %v221
      %v223 = vld [vmem:[#allocation6] sm:$0xf]
      %v224 = vld [vmem:[#allocation6 + $0x4] sm:$0xf]
      %v225 = vld [vmem:[#allocation6 + $0x8] sm:$0xf]
      %v226 = vld [vmem:[#allocation6 + $0xc] sm:$0xf]
      %v227 = vld [vmem:[#allocation6 + $0x10] sm:$0xf]
      %v228 = vld [vmem:[#allocation6 + $0x14] sm:$0xf]
      %v229 = vld [vmem:[#allocation6 + $0x18] sm:$0xf]
      %v230 = vld [vmem:[#allocation6 + $0x1c] sm:$0xf]
      %v231 = vld [vmem:[#allocation6 + $0x20] sm:$0xf]
      %v232 = vld [vmem:[#allocation6 + $0x24] sm:$0xf]
      %v233 = vld [vmem:[#allocation6 + $0x28] sm:$0xf]
      %v234 = vld [vmem:[#allocation6 + $0x2c] sm:$0xf]
      %v235 = vld [vmem:[#allocation6 + $0x30] sm:$0xf]
      %v236 = vld [vmem:[#allocation6 + $0x34] sm:$0xf]
      %v237 = vld [vmem:[#allocation6 + $0x38] sm:$0xf]
      %v238 = vld [vmem:[#allocation6 + $0x3c] sm:$0xf]
      %v239 = vld [vmem:[%s6] sm:$0x1]
      %v241 = vlaneseq
      %v242 = vshrl.u32 %v241, 7
      %v243 = vsub.s32 0, %v242
      %v244 = vrot.slane %v239, %v243
      %v262 = vunpack.c.l.b16 %v223
      %v263 = vunpack.c.l.b16 %v224
      %v264 = vunpack.c.l.b16 %v225
      %v265 = vunpack.c.l.b16 %v226
      %v266 = vunpack.c.l.b16 %v227
      %v267 = vunpack.c.l.b16 %v228
      %v268 = vunpack.c.l.b16 %v229
      %v269 = vunpack.c.l.b16 %v230
      %v270 = vunpack.c.l.b16 %v231
      %v271 = vunpack.c.l.b16 %v232
      %v272 = vunpack.c.l.b16 %v233
      %v273 = vunpack.c.l.b16 %v234
      %v274 = vunpack.c.l.b16 %v235
      %v275 = vunpack.c.l.b16 %v236
      %v276 = vunpack.c.l.b16 %v237
      %v277 = vunpack.c.l.b16 %v238
      %v278 = vpack.c.b16 %v263, %v262
      %v279 = vpack.c.b16 %v265, %v264
      %v280 = vpack.c.b16 %v267, %v266
      %v281 = vpack.c.b16 %v269, %v268
      %v282 = vpack.c.b16 %v271, %v270
      %v283 = vpack.c.b16 %v273, %v272
      %v284 = vpack.c.b16 %v275, %v274
      %v285 = vpack.c.b16 %v277, %v276
      %294 = vmatprep.subr.bf16.mxu0 0
      %295 = vmatpush1.bf16.msra.mxu0 %v278
      %296 = vmatprep.subr.bf16.mxu0 0
      %297 = vmatpush1.bf16.msra.mxu0 %v279
      %298 = vmatprep.subr.bf16.mxu0 0
      %299 = vmatpush1.bf16.msra.mxu0 %v280
      %300 = vmatprep.subr.bf16.mxu0 0
      %301 = vmatpush1.bf16.msra.mxu0 %v281
      %302 = vmatprep.subr.bf16.mxu0 0
      %303 = vmatpush1.bf16.msra.mxu0 %v282
      %304 = vmatprep.subr.bf16.mxu0 0
      %305 = vmatpush1.bf16.msra.mxu0 %v283
      %306 = vmatprep.subr.bf16.mxu0 0
      %307 = vmatpush1.bf16.msra.mxu0 %v284
      %308 = vmatprep.subr.bf16.mxu0 0
      %309 = vmatpush1.bf16.msra.mxu0 %v285
      %310 = vmatprep.subr.bf16.mxu0 0
      %311 = vmatpush1.bf16.msra.mxu0 0
      %312 = vmatprep.subr.bf16.mxu0 0
      %313 = vmatpush1.bf16.msra.mxu0 0
      %314 = vmatprep.subr.bf16.mxu0 0
      %315 = vmatpush1.bf16.msra.mxu0 0
      %316 = vmatprep.subr.bf16.mxu0 0
      %317 = vmatpush1.bf16.msra.mxu0 0
      %318 = vmatprep.subr.bf16.mxu0 0
      %319 = vmatpush1.bf16.msra.mxu0 0
      %320 = vmatprep.subr.bf16.mxu0 0
      %321 = vmatpush1.bf16.msra.mxu0 0
      %322 = vmatprep.subr.bf16.mxu0 0
      %323 = vmatpush1.bf16.msra.mxu0 0
      %324 = vmatprep.subr.bf16.mxu0 0
      %325 = vmatpush1.bf16.msra.mxu0 0
      %326 = vmatprep.mubr.bf16.mxu0 0
      %327 = vmatmul.mubr.bf16.gmra.mrb[0].mxu0 %v222
      %v328 = vpop.f32.mrb[0].mxu0
      %v329 = vadd.f32 %v244, %v328
      %v330 = vpop.f32.mrb[0].mxu0
      %v331 = vpop.f32.mrb[0].mxu0
      %v332 = vpop.f32.mrb[0].mxu0
      %333 = vdwg.mxu0
      %v334 = vtanh.pop %v329
      %v335 = vpack.c.bf16 %v334, %v334
      %v336 = vld [vmem:[#allocation8] sm:$0xf]
      %v337 = vld [vmem:[#allocation8 + $0x4] sm:$0xf]
      %v338 = vld [vmem:[#allocation8 + $0x8] sm:$0xf]
      %v339 = vld [vmem:[#allocation8 + $0xc] sm:$0xf]
      %v340 = vld [vmem:[#allocation8 + $0x10] sm:$0xf]
      %v341 = vld [vmem:[#allocation8 + $0x14] sm:$0xf]
      %v342 = vld [vmem:[#allocation8 + $0x18] sm:$0xf]
      %v343 = vld [vmem:[#allocation8 + $0x1c] sm:$0xf]
      %v344 = vld [vmem:[#allocation8 + $0x20] sm:$0xf]
      %v345 = vld [vmem:[#allocation8 + $0x24] sm:$0xf]
      %v346 = vld [vmem:[#allocation8 + $0x28] sm:$0xf]
      %v347 = vld [vmem:[#allocation8 + $0x2c] sm:$0xf]
      %v348 = vld [vmem:[#allocation8 + $0x30] sm:$0xf]
      %v349 = vld [vmem:[#allocation8 + $0x34] sm:$0xf]
      %v350 = vld [vmem:[#allocation8 + $0x38] sm:$0xf]
      %v351 = vld [vmem:[#allocation8 + $0x3c] sm:$0xf]
      %v352 = vld [vmem:[%s8] sm:$0x1]
      %v354 = vlaneseq
      %v355 = vshrl.u32 %v354, 7
      %v356 = vsub.s32 0, %v355
      %v357 = vrot.slane %v352, %v356
      %v375 = vunpack.c.l.b16 %v336
      %v376 = vunpack.c.l.b16 %v337
      %v377 = vunpack.c.l.b16 %v338
      %v378 = vunpack.c.l.b16 %v339
      %v379 = vunpack.c.l.b16 %v340
      %v380 = vunpack.c.l.b16 %v341
      %v381 = vunpack.c.l.b16 %v342
      %v382 = vunpack.c.l.b16 %v343
      %v383 = vunpack.c.l.b16 %v344
      %v384 = vunpack.c.l.b16 %v345
      %v385 = vunpack.c.l.b16 %v346
      %v386 = vunpack.c.l.b16 %v347
      %v387 = vunpack.c.l.b16 %v348
      %v388 = vunpack.c.l.b16 %v349
      %v389 = vunpack.c.l.b16 %v350
      %v390 = vunpack.c.l.b16 %v351
      %v391 = vpack.c.b16 %v376, %v375
      %v392 = vpack.c.b16 %v378, %v377
      %v393 = vpack.c.b16 %v380, %v379
      %v394 = vpack.c.b16 %v382, %v381
      %v395 = vpack.c.b16 %v384, %v383
      %v396 = vpack.c.b16 %v386, %v385
      %v397 = vpack.c.b16 %v388, %v387
      %v398 = vpack.c.b16 %v390, %v389
      %407 = vmatprep.subr.bf16.mxu0 0
      %408 = vmatpush1.bf16.msra.mxu0 %v391
      %409 = vmatprep.subr.bf16.mxu0 0
      %410 = vmatpush1.bf16.msra.mxu0 %v392
      %411 = vmatprep.subr.bf16.mxu0 0
      %412 = vmatpush1.bf16.msra.mxu0 %v393
      %413 = vmatprep.subr.bf16.mxu0 0
      %414 = vmatpush1.bf16.msra.mxu0 %v394
      %415 = vmatprep.subr.bf16.mxu0 0
      %416 = vmatpush1.bf16.msra.mxu0 %v395
      %417 = vmatprep.subr.bf16.mxu0 0
      %418 = vmatpush1.bf16.msra.mxu0 %v396
      %419 = vmatprep.subr.bf16.mxu0 0
      %420 = vmatpush1.bf16.msra.mxu0 %v397
      %421 = vmatprep.subr.bf16.mxu0 0
      %422 = vmatpush1.bf16.msra.mxu0 %v398
      %423 = vmatprep.subr.bf16.mxu0 0
      %424 = vmatpush1.bf16.msra.mxu0 0
      %425 = vmatprep.subr.bf16.mxu0 0
      %426 = vmatpush1.bf16.msra.mxu0 0
      %427 = vmatprep.subr.bf16.mxu0 0
      %428 = vmatpush1.bf16.msra.mxu0 0
      %429 = vmatprep.subr.bf16.mxu0 0
      %430 = vmatpush1.bf16.msra.mxu0 0
      %431 = vmatprep.subr.bf16.mxu0 0
      %432 = vmatpush1.bf16.msra.mxu0 0
      %433 = vmatprep.subr.bf16.mxu0 0
      %434 = vmatpush1.bf16.msra.mxu0 0
      %435 = vmatprep.subr.bf16.mxu0 0
      %436 = vmatpush1.bf16.msra.mxu0 0
      %437 = vmatprep.subr.bf16.mxu0 0
      %438 = vmatpush1.bf16.msra.mxu0 0
      %439 = vmatprep.mubr.bf16.mxu0 0
      %440 = vmatmul.mubr.bf16.gmra.mrb[0].mxu0 %v335
      %v441 = vpop.f32.mrb[0].mxu0
      %v442 = vadd.f32 %v357, %v441
      %v443 = vpop.f32.mrb[0].mxu0
      %v444 = vpop.f32.mrb[0].mxu0
      %v445 = vpop.f32.mrb[0].mxu0
      %446 = vdwg.mxu0
      %v447 = vlaneseq
      %v448 = vand.u32 %v447, 127
      %vm449 = vcmp.lt.s32.totalorder %v448, 2
      %v450 = vsel %vm449, %v442, -1e+30
      %451 = vmax.xlane.f32.xlu0 %v450
      %v452 = vpop.xlane.xlu0 %451
      %v453 = vsub.f32 %v450, %v452
      %v454 = vmul.f32 %v453, 1.442695
      %v455 = vpow.pop %v454
      %456 = vadd.xlane.f32.xlu0 %v455
      %v457 = vpop.xlane.xlu0 %456
      %v458 = vrcp.pop %v457
      %v459 = vmul.f32 %v455, %v458
      %460 = vst [vmem:[#allocation9] sm:$0xff] %v459
    $region57: #{tpu_custom_call.1} parent=1 // pred_fallthru
      _
    // Predicated region
    $region58: #{tpu_custom_call.1} parent=1 // pred_check
      _
    $region59: #{tpu_custom_call.1} parent=1 // pred_check_branch
      %462 = sbr.rel (0) target = $region61
    $region60: #{tpu_custom_call.1} parent=1 // pred_region
      %s464 = ssub.s32 128, 128
      %465 = vsyncadd [#allocation5], %s464
      %s467 = sshll.u32 [#allocation9], 4
      %s468 = int_to_ptr.vmem [resolvable:$true] %s467
      %470 = dma.vmem_to_hbm [thread:$0]  %s468, 128, %s9, [#allocation5]
    $region61: #{tpu_custom_call.1} parent=1 // pred_fallthru
      _
    // Predicated region
    $region62: #{tpu_custom_call.1} parent=1 // pred_check
      _
    $region63: #{tpu_custom_call.1} parent=1 // pred_check_branch
      %472 = sbr.rel (0) target = $region65
    $region64: #{tpu_custom_call.1} parent=1 // pred_region
      %473 = dma.done [#allocation5], 128
    $region65: #{tpu_custom_call.1} parent=1 // pred_fallthru
      _
    %474 = vsyncpa [#allocation4], 1
    %475 = vsyncpa [#allocation7], 1
    %476 = vsyncpa [#allocation5], 1

</llo_original>
